<compile_context>
chip_gen: v5e
topology: v5e:2x2
jax: 0.10.0
libtpu: 0.0.40
codegen_flags: <defaults>
</compile_context>

<pallas_src>
import jax
import jax.numpy as jnp
from jax.experimental import pallas as pl
from jax.experimental.pallas import tpu as pltpu

_LANES = 128
_DEFAULT_TILE_BYTES = 4 * 1024 * 1024    # per-block bytes (in the input dtype)
_VMEM_LIMIT_BYTES = 48 * 1024 * 1024     # explicit scoped-VMEM limit (safe on v5e/v6e/v7x)
_MIN_PIPELINE_STEPS = 4                  # want >=4 grid steps for overlap + 2-TC sharding


def _round_up(x, m):
    return ((x + m - 1) // m) * m


def _swish_kernel(beta_ref, x_ref, o_ref):
    # beta_ref: SMEM (1,) f32 scalar; x_ref / o_ref: (tr, 128) VMEM tiles.
    # Compute in f32 regardless of the I/O dtype (free: kernel is HBM-bound).
    x = x_ref[...].astype(jnp.float32)
    beta = beta_ref[0]
    o_ref[...] = (x * jax.nn.sigmoid(beta * x)).astype(o_ref.dtype)


def _swish_2d(x2d, beta_arr, *, tile_bytes):
    """Run the streaming kernel over a lane-dense (rows, 128) slab."""
    rows, lanes = x2d.shape
    itemsize = jnp.dtype(x2d.dtype).itemsize
    # dtype packing granularity along sublanes: 8 (f32), 16 (bf16), 32 (int8/fp8)
    sub = max(8, 32 // itemsize)

    # Large row tile from the byte budget, rounded to the sublane packing ...
    tr = max(sub, (tile_bytes // (lanes * itemsize)) // sub * sub)
    # ... but capped so the grid has >= _MIN_PIPELINE_STEPS steps when the
    # tensor is big enough (pipeline overlap + both v7x TensorCores busy).
    rows_rounded = _round_up(rows, sub)
    tr_for_steps = max(sub, _round_up(pl.cdiv(rows_rounded, _MIN_PIPELINE_STEPS), sub))
    tr = min(tr, tr_for_steps)
    grid = (pl.cdiv(rows, tr),)

    n = rows * lanes
    cost = pl.CostEstimate(
        flops=5 * n,             # mul + sigmoid arith + mul (rough)
        transcendentals=n,       # one exp per element
        bytes_accessed=2 * n * itemsize,
    )

    return pl.pallas_call(
        _swish_kernel,
        out_shape=jax.ShapeDtypeStruct((rows, lanes), x2d.dtype),
        grid=grid,
        in_specs=[
            pl.BlockSpec(memory_space=pltpu.SMEM),           # beta scalar
            pl.BlockSpec((tr, lanes), lambda i: (i, 0)),     # x tile
        ],
        out_specs=pl.BlockSpec((tr, lanes), lambda i: (i, 0)),
        compiler_params=pltpu.CompilerParams(
            dimension_semantics=("parallel",),               # megacore / v7x 2-TC split
            vmem_limit_bytes=_VMEM_LIMIT_BYTES,
        ),
        cost_estimate=cost,
    )(beta_arr, x2d)


def swish(x, beta, *, tile_bytes=_DEFAULT_TILE_BYTES):
    """Swish(x) = x * sigmoid(beta * x), elementwise, any shape, float dtype."""
    orig_shape = x.shape
    orig_dtype = x.dtype
    n = x.size

    beta_arr = jnp.asarray(beta, dtype=jnp.float32).reshape((1,))

    def _jnp_swish(v):
        v32 = v.astype(jnp.float32)
        return (v32 * jax.nn.sigmoid(beta_arr[0] * v32)).astype(orig_dtype)

    if n == 0:
        return x

    x_flat = jnp.reshape(x, (-1,))

    if n % _LANES == 0:
        # Common path: zero-copy reshape to a lane-dense (rows, 128) slab.
        x2d = jnp.reshape(x_flat, (n // _LANES, _LANES))
        out2d = _swish_2d(x2d, beta_arr, tile_bytes=tile_bytes)
        return jnp.reshape(out2d, orig_shape)

    # Unaligned total size: kernel on the 128-aligned bulk, plain jnp on the
    # (<128-element) tail.  Avoids the whole-array pad + post-kernel slice
    # (each a full extra HBM pass) of the naive padding approach.
    bulk = (n // _LANES) * _LANES
    if bulk == 0:
        # Tensor smaller than one lane row -- not worth a kernel launch.
        return jnp.reshape(_jnp_swish(x_flat), orig_shape)

    x_bulk = jnp.reshape(x_flat[:bulk], (bulk // _LANES, _LANES))
    out_bulk = jnp.reshape(_swish_2d(x_bulk, beta_arr, tile_bytes=tile_bytes), (-1,))
    out_tail = _jnp_swish(x_flat[bulk:])
    return jnp.reshape(jnp.concatenate([out_bulk, out_tail]), orig_shape)


class SwishModule:
    """Mirror of the PyTorch Swish module: learnable scalar beta, init = 1.0."""

    def __init__(self, dtype=jnp.float32):
        # deterministic init, same as torch.ones(())
        self.beta = jnp.ones((), dtype=dtype)

    def __call__(self, x):
        return swish(x, self.beta)


if __name__ == "__main__":
    key = jax.random.PRNGKey(0)
    mod = SwishModule()

    # 1) NCHW input (n % 128 == 0 -> zero-copy kernel path, multi-step grid)
    x = jax.random.normal(key, (2, 4, 16, 16), dtype=jnp.float32)
    y = jax.block_until_ready(mod(x))
    ref = x * jax.nn.sigmoid(mod.beta * x)
    assert y.shape == x.shape and y.dtype == x.dtype
    assert jnp.max(jnp.abs(y - ref)) < 1e-6

    # 2) tiny odd shape (< one lane row -> plain-jnp fallback)
    x2 = jax.random.normal(jax.random.PRNGKey(1), (3, 5, 7), dtype=jnp.float32)
    y2 = jax.block_until_ready(mod(x2))
    ref2 = x2 * jax.nn.sigmoid(mod.beta * x2)
    assert y2.shape == x2.shape and y2.dtype == x2.dtype
    assert jnp.max(jnp.abs(y2 - ref2)) < 1e-6

    # 3) unaligned size with an aligned bulk (exercises bulk-kernel + jnp tail)
    x3 = jax.random.normal(jax.random.PRNGKey(2), (5, 300), dtype=jnp.float32)
    y3 = jax.block_until_ready(mod(x3))
    ref3 = x3 * jax.nn.sigmoid(mod.beta * x3)
    assert y3.shape == x3.shape and y3.dtype == x3.dtype
    assert jnp.max(jnp.abs(y3 - ref3)) < 1e-6

    # 4) bf16 smoke test (kernel math is f32; only I/O is bf16)
    x4 = jax.random.normal(jax.random.PRNGKey(3), (2, 4, 16, 16), dtype=jnp.bfloat16)
    y4 = jax.block_until_ready(mod(x4))
    x4f = x4.astype(jnp.float32)
    ref4 = x4f * jax.nn.sigmoid(x4f)
    assert y4.shape == x4.shape and y4.dtype == x4.dtype
    assert jnp.max(jnp.abs(y4.astype(jnp.float32) - ref4)) < 2e-2

    print("KERNEL_OK")
</pallas_src>

<mosaic_0001>
module attributes {stable_mosaic.version = 11 : i64} {
  func.func @_swish_kernel(%arg0: i32, %arg1: memref<1xf32, #tpu.memory_space<smem>>, %arg2: memref<8x128xf32, #tpu.memory_space<vmem>>, %arg3: memref<8x128xf32, #tpu.memory_space<vmem>>) attributes {dimension_semantics = [#tpu.dimension_semantics<parallel>], iteration_bounds = array<i64: 2>, scalar_prefetch = 0 : i64, scratch_operands = 0 : i64, tpu.core_type = #tpu.core_type<tc>, window_params = [{transform_indices = @transform_0, window_bounds = array<i64: 1>}, {transform_indices = @transform_1, window_bounds = array<i64: 8, 128>}, {transform_indices = @transform_2, window_bounds = array<i64: 8, 128>}]} {
    %c0 = arith.constant 0 : index
    %c0_0 = arith.constant 0 : index
    %0 = vector.load %arg2[%c0, %c0_0] : memref<8x128xf32, #tpu.memory_space<vmem>>, vector<8x128xf32>
    %c0_1 = arith.constant 0 : index
    %1 = memref.load %arg1[%c0_1] : memref<1xf32, #tpu.memory_space<smem>>
    %2 = vector.broadcast %1 : f32 to vector<8x128xf32>
    %3 = arith.mulf %2, %0 : vector<8x128xf32>
    %4 = arith.negf %3 : vector<8x128xf32>
    %5 = math.exp %4 : vector<8x128xf32>
    %cst = arith.constant 1.000000e+00 : f32
    %6 = vector.broadcast %cst : f32 to vector<8x128xf32>
    %7 = arith.addf %6, %5 : vector<8x128xf32>
    %8 = arith.divf %6, %7 : vector<8x128xf32>
    %9 = arith.mulf %0, %8 : vector<8x128xf32>
    %c0_2 = arith.constant 0 : index
    %c0_3 = arith.constant 0 : index
    %10 = vector.load %arg3[%c0_2, %c0_3] : memref<8x128xf32, #tpu.memory_space<vmem>>, vector<8x128xf32>
    tpu.vector_store %arg3[%c0_2, %c0_3], %9 {strides = array<i32>} : memref<8x128xf32, #tpu.memory_space<vmem>>, vector<8x128xf32>,
    return
  }
  func.func @transform_0(%arg0: i32) -> i32 {
    %c0_i32 = arith.constant 0 : i32
    %c0_i32_0 = arith.constant 0 : i32
    return %c0_i32 : i32
  }
  func.func @transform_1(%arg0: i32) -> (i32, i32) {
    %c0_i32 = arith.constant 0 : i32
    %c0_i32_0 = arith.constant 0 : i32
    return %arg0, %c0_i32 : i32, i32
  }
  func.func @transform_2(%arg0: i32) -> (i32, i32) {
    %c0_i32 = arith.constant 0 : i32
    %c0_i32_0 = arith.constant 0 : i32
    return %arg0, %c0_i32 : i32, i32
  }
}

</mosaic_0001>

<llo_original>
// kernel: tpu_custom_call.1
$region0: #{tpu_custom_call.1}
  #allocation0 [shape = 'u32[]', space=smem, size = 0x4, offset = 0x4, fixed_abs, tag = 'smem constant byte address 0x4 - core index']
  #allocation1 [shape = 'u32[72,128]{1,0:T(1,128)}', space=vmem, size = 0x9000, scoped, tag = 'internal scratch']
  #allocation2 [shape = 'f32[1]{0:T(128)S(6)}', space=smem, size = 0x200, scoped, tag = 'scoped memory for tpu_custom_call.1']
  %s0 = inlined_call_operand.<no memory space> [shape: f32[1], index: 0, kind: input, shape index: {}]
  %s1 = inlined_call_operand.hbm [shape: f32[16,128], index: 1, kind: input, shape index: {}]
  %s2 = inlined_call_operand.hbm [shape: f32[16,128], index: 2, kind: output, shape index: {}]
  %s3 = sld [smem:[#allocation0]]
  $region45: #{tpu_custom_call.1} parent=0
    _
  %s5 = ssub.s32 1, %s3
  %s6 = scalar_select 0, %s5, %s3
  %7 = sst [smem:[#allocation2]] %s0
  $region1: #{tpu_custom_call.1} parent=0
    #allocation3 [shape = 'u8[8192]{0}', space=vmem, size = 0x2000, scoped, tag = 'input window, operand 1']
    #allocation4 [shape = 's32[2]{0}', space=sflag, size = 0x8, scoped, tag = 'scoped memory for tpu_custom_call.1']
    #allocation5 [shape = 's32[2]{0}', space=sflag, size = 0x8, scoped, tag = 'scoped memory for tpu_custom_call.1']
    #allocation6 [shape = 'u8[8192]{0}', space=vmem, size = 0x2000, scoped, tag = 'output window, operand 0']
    %8 = vsyncpa [#allocation4], 0
    %s9 = scalar_lea.sflag [#allocation4], 1
    %10 = vsyncpa %s9, 0
    %11 = vsyncpa [#allocation5], 0
    %s12 = scalar_lea.sflag [#allocation5], 1
    %13 = vsyncpa %s12, 0
    loop: start=0, step=1, limit=4
    $region2: #{tpu_custom_call.1} parent=1 // loop_pre_header
      _
    $region3: #{tpu_custom_call.1} parent=1 // loop_header
      %s15 = sphi 0, %s19
      %p16 = scmp.ge.s32.totalorder %s15, 4
      %s23 = sphi 0, %s23
      %s25 = sphi 0, %s23
      %s26 = sphi 0, %s25
      %s40 = sphi 0, %s26
      %s46 = sphi 0, %s48
      %s49 = sphi 0, %s46
      %s50 = sphi 0, %s49
      %s66 = sphi 0, %s50
      %s72 = sphi 0, %s74
      %s75 = sphi 0, %s72
      %s76 = sphi 0, %s75
      %s92 = sphi 0, %s76
    $region4: #{tpu_custom_call.1} parent=1 // loop_header_branch
      %18 = sbr.rel (%p16) target = $region8
    $region5: #{tpu_custom_call.1} parent=1 // loop_body
      %s20 = ssub.s32 %s15, 1
      %s21 = ssub.s32 %s15, 2
      %s22 = sadd.s32 %s15, 1
      %s24 = sadd.s32 %s23, 1
      %p27 = scmp.eq.s32.totalorder %s15, 1
      %p28 = scmp.ne.s32.totalorder %s23, %s25
      %p29 = scmp.eq.s32.totalorder %s15, 0
      %p30 = por %p28, %p29
      %p31 = scmp.ne.s32.totalorder %s23, %s25
      %p32 = scmp.eq.s32.totalorder %s20, 1
      %p33 = por %p31, %p32
      %p34 = scmp.ne.s32.totalorder %s25, %s26
      %p35 = scmp.eq.s32.totalorder %s20, 0
      %p36 = por %p34, %p35
      %p37 = scmp.ne.s32.totalorder %s25, %s26
      %p38 = scmp.eq.s32.totalorder %s21, 1
      %p39 = por %p37, %p38
      %p41 = scmp.ne.s32.totalorder %s26, %s40
      %p42 = scmp.eq.s32.totalorder %s21, 0
      %p43 = por %p41, %p42
      %s44 = ssub.s32 %s15, %s22
      %p45 = scmp.eq.s32.totalorder %s44, 0
      %s47 = sadd.s32 %s46, 1
      %s48 = scalar_select %p45, %s46, %s47
      %p51 = pneg %p45
      %p52 = scmp.eq.s32.totalorder %s15, 1
      %p53 = por %p51, %p52
      %p54 = scmp.ne.s32.totalorder %s46, %s49
      %p55 = scmp.eq.s32.totalorder %s15, 0
      %p56 = por %p54, %p55
      %p57 = scmp.ne.s32.totalorder %s46, %s49
      %p58 = scmp.eq.s32.totalorder %s20, 1
      %p59 = por %p57, %p58
      %p60 = scmp.ne.s32.totalorder %s49, %s50
      %p61 = scmp.eq.s32.totalorder %s20, 0
      %p62 = por %p60, %p61
      %p63 = scmp.ne.s32.totalorder %s49, %s50
      %p64 = scmp.eq.s32.totalorder %s21, 1
      %p65 = por %p63, %p64
      %p67 = scmp.ne.s32.totalorder %s50, %s66
      %p68 = scmp.eq.s32.totalorder %s21, 0
      %p69 = por %p67, %p68
      %s70 = ssub.s32 %s15, %s22
      %p71 = scmp.eq.s32.totalorder %s70, 0
      %s73 = sadd.s32 %s72, 1
      %s74 = scalar_select %p71, %s72, %s73
      %p77 = pneg %p71
      %p78 = scmp.eq.s32.totalorder %s15, 1
      %p79 = por %p77, %p78
      %p80 = scmp.ne.s32.totalorder %s72, %s75
      %p81 = scmp.eq.s32.totalorder %s15, 0
      %p82 = por %p80, %p81
      %p83 = scmp.ne.s32.totalorder %s72, %s75
      %p84 = scmp.eq.s32.totalorder %s20, 1
      %p85 = por %p83, %p84
      %p86 = scmp.ne.s32.totalorder %s75, %s76
      %p87 = scmp.eq.s32.totalorder %s20, 0
      %p88 = por %p86, %p87
      %p89 = scmp.ne.s32.totalorder %s75, %s76
      %p90 = scmp.eq.s32.totalorder %s21, 1
      %p91 = por %p89, %p90
      %p93 = scmp.ne.s32.totalorder %s76, %s92
      %p94 = scmp.eq.s32.totalorder %s21, 0
      %p95 = por %p93, %p94
      %p96 = scmp.le.s32.totalorder 1, %s15
      %p97 = scmp.lt.s32.totalorder %s15, 3
      %p98 = pnand %p96, %p97
      %p99 = pneg %p98
      // Predicated region
      $region9: #{tpu_custom_call.1} parent=5 // pred_check
        _
      $region10: #{tpu_custom_call.1} parent=5 // pred_check_branch
        %101 = sbr.rel (%p98) target = $region12
      $region11: #{tpu_custom_call.1} parent=5 // pred_region
        %s102 = ssub.s32 %s15, 1
        // Predicated region
        $region13: #{tpu_custom_call.1} parent=11 // pred_check
          %p103 = pneg %p36
        $region14: #{tpu_custom_call.1} parent=11 // pred_check_branch
          %105 = sbr.rel (%p103) target = $region16
        $region15: #{tpu_custom_call.1} parent=11 // pred_region
          _
        $region16: #{tpu_custom_call.1} parent=11 // pred_fallthru
          _
      $region12: #{tpu_custom_call.1} parent=5 // pred_fallthru
        _
      %p106 = scmp.lt.s32.totalorder %s15, 2
      // Predicated region
      $region17: #{tpu_custom_call.1} parent=5 // pred_check
        %p107 = pneg %p106
      $region18: #{tpu_custom_call.1} parent=5 // pred_check_branch
        %109 = sbr.rel (%p107) target = $region20
      $region19: #{tpu_custom_call.1} parent=5 // pred_region
        // Predicated region
        $region21: #{tpu_custom_call.1} parent=19 // pred_check
          %p110 = pneg %p56
        $region22: #{tpu_custom_call.1} parent=19 // pred_check_branch
          %112 = sbr.rel (%p110) target = $region24
        $region23: #{tpu_custom_call.1} parent=19 // pred_region
          %s113 = sand.u32 %s46, 1
          %s114 = scalar_lea.sflag [#allocation4], %s113
          %s115 = sand.u32 %s46, 1
          %s116 = smul.addr %s115, 8
          %s117 = scalar_lea.vmem [#allocation3], %s116
          %119 = vsyncadd %s114, 0
          %s120 = smul.addr %s15, 8
          %s121 = scalar_lea.hbm %s1, %s120
          %s123 = sshll.u32 %s121, 4
          %s124 = int_to_ptr.hbm [resolvable:$true] %s123
          %s125 = sshll.u32 %s117, 4
          %s126 = int_to_ptr.vmem [resolvable:$true] %s125
          %128 = dma.hbm_to_vmem [thread:$0]  %s124, 128, %s126, %s114
        $region24: #{tpu_custom_call.1} parent=19 // pred_fallthru
          _
      $region20: #{tpu_custom_call.1} parent=5 // pred_fallthru
        _
      %p129 = scmp.le.s32.totalorder 1, %s15
      %p130 = scmp.lt.s32.totalorder %s15, 3
      %p131 = pnand %p129, %p130
      %p132 = pneg %p131
      // Predicated region
      $region25: #{tpu_custom_call.1} parent=5 // pred_check
        _
      $region26: #{tpu_custom_call.1} parent=5 // pred_check_branch
        %134 = sbr.rel (%p131) target = $region28
      $region27: #{tpu_custom_call.1} parent=5 // pred_region
        %s135 = ssub.s32 %s15, 1
        %s136 = sand.u32 %s49, 1
        %s137 = scalar_lea.sflag [#allocation4], %s136
        %s138 = sand.u32 %s49, 1
        %s139 = smul.addr %s138, 8
        %s140 = scalar_lea.vmem [#allocation3], %s139
        // Predicated region
        $region29: #{tpu_custom_call.1} parent=27 // pred_check
          %p141 = pneg %p62
        $region30: #{tpu_custom_call.1} parent=27 // pred_check_branch
          %143 = sbr.rel (%p141) target = $region32
        $region31: #{tpu_custom_call.1} parent=27 // pred_region
          %145 = dma.done %s137, 128
        $region32: #{tpu_custom_call.1} parent=27 // pred_fallthru
          _
        %p146 = pneg %p36
        %p147 = pneg %p33
        %s148 = sand.u32 %s49, 1
        %s149 = scalar_lea.sflag [#allocation4], %s148
        %s150 = sand.u32 %s49, 1
        %s151 = smul.addr %s150, 8
        %s152 = scalar_lea.vmem [#allocation3], %s151
        %p153 = pneg %p62
        %p154 = pneg %p59
        %p155 = pneg %p88
        %p156 = pneg %p85
        %s157 = sand.u32 %s75, 1
        %s158 = scalar_lea.sflag [#allocation5], %s157
        %s159 = sand.u32 %s75, 1
        %s160 = smul.addr %s159, 8
        %s161 = scalar_lea.vmem [#allocation6], %s160
        %v162 = vld [vmem:[%s140] sm:$0xff]
        %s163 = sld [smem:[#allocation2]]
        %v164 = vstv %s163
        %v165 = vmul.f32 %v164, %v162
        %v166 = vxor.u32 %v165, 2147483648
        %v167 = vmul.f32 %v166, 1.442695
        %v168 = vpow.pop %v167
        %v169 = vadd.f32 %v168, 1.0
        %v170 = vrcp.pop %v169
        %v171 = vmul.f32 %v169, %v170
        %v172 = vsub.f32 1.0, %v171
        %v173 = vmul.f32 %v170, %v172
        %v174 = vadd.f32 %v170, %v173
        %vm175 = vweird.f32 %v169
        %vm176 = vweird.f32 %v170
        %vm177 = vmor %vm175, %vm176
        %v178 = vsel %vm177, %v170, %v174
        %v179 = vand.u32 2147483647, %v169
        %vm180 = vcmp.eq.f32.partialorder %v179, 8.507059e+37
        %v181 = vand.u32 %v169, 2147483648
        %v182 = vor.u32 1.1754944e-38, %v181
        %v183 = vsel %vm180, %v182, %v178
        %v184 = vmul.f32 1.0, %v183
        %v185 = vmul.f32 %v162, %v184
        %186 = vst [vmem:[%s161] sm:$0xff] %v185
        %s187 = sand.u32 %s75, 1
        %s188 = scalar_lea.sflag [#allocation5], %s187
        %s189 = sand.u32 %s75, 1
        %s190 = smul.addr %s189, 8
        %s191 = scalar_lea.vmem [#allocation6], %s190
        // Predicated region
        $region33: #{tpu_custom_call.1} parent=27 // pred_check
          %p192 = pneg %p85
        $region34: #{tpu_custom_call.1} parent=27 // pred_check_branch
          %194 = sbr.rel (%p192) target = $region36
        $region35: #{tpu_custom_call.1} parent=27 // pred_region
          %196 = vsyncadd %s188, 0
          %s197 = smul.addr %s20, 8
          %s198 = scalar_lea.hbm %s2, %s197
          %s200 = sshll.u32 %s191, 4
          %s201 = int_to_ptr.vmem [resolvable:$true] %s200
          %s202 = sshll.u32 %s198, 4
          %s203 = int_to_ptr.hbm [resolvable:$true] %s202
          %205 = dma.vmem_to_hbm [thread:$0]  %s201, 128, %s203, %s188
        $region36: #{tpu_custom_call.1} parent=27 // pred_fallthru
          _
      $region28: #{tpu_custom_call.1} parent=5 // pred_fallthru
        _
      %p206 = scmp.le.s32.totalorder 2, %s15
      // Predicated region
      $region37: #{tpu_custom_call.1} parent=5 // pred_check
        %p207 = pneg %p206
      $region38: #{tpu_custom_call.1} parent=5 // pred_check_branch
        %209 = sbr.rel (%p207) target = $region40
      $region39: #{tpu_custom_call.1} parent=5 // pred_region
        %s210 = ssub.s32 %s15, 2
        // Predicated region
        $region41: #{tpu_custom_call.1} parent=39 // pred_check
          %p211 = pneg %p91
        $region42: #{tpu_custom_call.1} parent=39 // pred_check_branch
          %213 = sbr.rel (%p211) target = $region44
        $region43: #{tpu_custom_call.1} parent=39 // pred_region
          %s214 = sand.u32 %s76, 1
          %s215 = scalar_lea.sflag [#allocation5], %s214
          %s216 = sand.u32 %s76, 1
          %s217 = smul.addr %s216, 8
          %s218 = scalar_lea.vmem [#allocation6], %s217
          %220 = dma.done %s215, 128
        $region44: #{tpu_custom_call.1} parent=39 // pred_fallthru
          _
      $region40: #{tpu_custom_call.1} parent=5 // pred_fallthru
        _
    $region6: #{tpu_custom_call.1} parent=1 // loop_footer
      %s19 = sadd.s32 1, %s15
    $region7: #{tpu_custom_call.1} parent=1 // loop_footer_branch
      %14 = sbr.rel target = $region3
    $region8: #{tpu_custom_call.1} parent=1 // loop_exit
      _
    %221 = vsyncpa [#allocation4], 1
    %s222 = scalar_lea.sflag [#allocation4], 1
    %223 = vsyncpa %s222, 1
    %224 = vsyncpa [#allocation5], 1
    %s225 = scalar_lea.sflag [#allocation5], 1
    %226 = vsyncpa %s225, 1

</llo_original>
